<compile_context>
chip_gen: v7x
topology: tpu7x:2x2x1
jax: 0.10.0
libtpu: 0.0.40
codegen_flags: <defaults>
</compile_context>

<pallas_src>
import jax
import jax.numpy as jnp
from jax.experimental import pallas as pl
from jax.experimental.pallas import tpu as pltpu


_LANE = 128
_TILE_CAP = 128 * 1024  # lanes per batch tile; at R=4 f32 -> 2 MiB per input buffer


def mixer_kernel(w_ref, r_ref, out_ref):
    """w_ref: (R,) weights in SMEM (scalar prefetch).
    r_ref: (R, TB) lane-dense rewards tile.  out_ref: (1, TB)."""
    R = r_ref.shape[0]
    acc = w_ref[0] * r_ref[0:1, :].astype(jnp.float32)
    for k in range(1, R):  # R-1 unrolled VPU multiply-adds, no XLU reduce
        acc = acc + w_ref[k] * r_ref[k:k + 1, :].astype(jnp.float32)
    out_ref[...] = acc.astype(out_ref.dtype)


def make_mixer_weights(reward_shape, w0, w1, w2, w3):
    """Host-side equivalent of ConstantRewardMixer.__init__ weight setup.

    Normalization is done in Python float64 (matching numpy defaults) and only
    then cast to float32, mirroring the PyTorch module's `.float()`.
    """
    ws = [float(w0), float(w1), float(w2), float(w3)][: reward_shape[0]]
    total = sum(ws)
    return jnp.asarray([x / total for x in ws], dtype=jnp.float32)


def _round_up(x, m):
    return ((x + m - 1) // m) * m


def _choose_tiling(b):
    """Pick (lane-tile tb, padded batch) for the lane-major layout."""
    b_pad = _round_up(b, _LANE)
    if b_pad <= 2 * _LANE:
        return b_pad, b_pad  # tiny batch: one small tile
    # Prefer >= 2 grid steps (v7x has two TensorCores); tiles are multiples of
    # 128 lanes, capped so double-buffered in+out stays well under v7x's
    # 32 MiB default scoped VMEM.
    tb = min(_TILE_CAP, _round_up(b_pad // 2, _LANE))
    b_pad = _round_up(b_pad, tb)
    return tb, b_pad


def mix_rewards(rewards, weights):
    """reward = (rewards * weights[None, :]).sum(axis=1, keepdims=True)."""
    B, R = rewards.shape
    tb, b_pad = _choose_tiling(B)

    # Lane-major layout: (R, B) so batch maps onto the 128 lanes; zero-pad the
    # batch to a tile multiple (padded columns produce zeros, sliced off below).
    rt = rewards.T.astype(jnp.float32)
    if b_pad != B:
        rt = jnp.pad(rt, ((0, 0), (0, b_pad - B)))

    w = weights.astype(jnp.float32).reshape(R)

    out = pl.pallas_call(
        mixer_kernel,
        out_shape=jax.ShapeDtypeStruct((1, b_pad), jnp.float32),
        grid_spec=pltpu.PrefetchScalarGridSpec(
            num_scalar_prefetch=1,            # weights -> SMEM scalars
            grid=(b_pad // tb,),
            in_specs=[
                pl.BlockSpec((R, tb), lambda i, w_ref: (0, i)),  # rewards, lane-dense
            ],
            out_specs=pl.BlockSpec((1, tb), lambda i, w_ref: (0, i)),  # lane-dense out
        ),
        compiler_params=pltpu.CompilerParams(
            dimension_semantics=("parallel",),
        ),
    )(w, rt)

    # Back to the module's (B, 1) keepdim=True shape.
    return out[0, :B].reshape(B, 1)


def mix_rewards_ref(rewards, weights):
    """Pure-JAX reference."""
    return jnp.sum(rewards * weights.reshape(1, -1), axis=1, keepdims=True)


if __name__ == "__main__":
    BATCH = 8
    REWARD_SHAPE = (4,)           # reward_shape[0] = 4 -> uses all of w0..w3
    W0, W1, W2, W3 = 1.0, 2.0, 3.0, 4.0

    key = jax.random.PRNGKey(0)
    rewards = jax.random.normal(key, (BATCH, REWARD_SHAPE[0]), jnp.float32)

    weights = make_mixer_weights(REWARD_SHAPE, W0, W1, W2, W3)

    out = jax.block_until_ready(mix_rewards(rewards, weights))
    out_ref = mix_rewards_ref(rewards, weights)

    assert out.shape == (BATCH, 1)
    assert jnp.allclose(out, out_ref, atol=1e-5, rtol=1e-5)

    print("KERNEL_OK")
</pallas_src>

<mosaic_0001>
module attributes {stable_mosaic.version = 11 : i64} {
  func.func @mixer_kernel(%arg0: i32, %arg1: memref<4xf32, #tpu.memory_space<smem>>, %arg2: memref<4x128xf32, #tpu.memory_space<vmem>>, %arg3: memref<1x128xf32, #tpu.memory_space<vmem>>) attributes {dimension_semantics = [#tpu.dimension_semantics<parallel>], iteration_bounds = array<i64: 1>, scalar_prefetch = 1 : i64, scratch_operands = 0 : i64, tpu.core_type = #tpu.core_type<tc>, window_params = [{transform_indices = @transform_0, window_bounds = array<i64: 4, 128>}, {transform_indices = @transform_1, window_bounds = array<i64: 1, 128>}]} {
    %c0 = arith.constant 0 : index
    %0 = memref.load %arg1[%c0] : memref<4xf32, #tpu.memory_space<smem>>
    %c0_0 = arith.constant 0 : index
    %c0_1 = arith.constant 0 : index
    %1 = vector.load %arg2[%c0_0, %c0_1] : memref<4x128xf32, #tpu.memory_space<vmem>>, vector<1x128xf32>
    %2 = vector.broadcast %0 : f32 to vector<1x128xf32>
    %3 = arith.mulf %2, %1 : vector<1x128xf32>
    %c1 = arith.constant 1 : index
    %4 = memref.load %arg1[%c1] : memref<4xf32, #tpu.memory_space<smem>>
    %c1_2 = arith.constant 1 : index
    %c0_3 = arith.constant 0 : index
    %5 = vector.load %arg2[%c1_2, %c0_3] : memref<4x128xf32, #tpu.memory_space<vmem>>, vector<1x128xf32>
    %6 = vector.broadcast %4 : f32 to vector<1x128xf32>
    %7 = arith.mulf %6, %5 : vector<1x128xf32>
    %8 = arith.addf %3, %7 : vector<1x128xf32>
    %c2 = arith.constant 2 : index
    %9 = memref.load %arg1[%c2] : memref<4xf32, #tpu.memory_space<smem>>
    %c2_4 = arith.constant 2 : index
    %c0_5 = arith.constant 0 : index
    %10 = vector.load %arg2[%c2_4, %c0_5] : memref<4x128xf32, #tpu.memory_space<vmem>>, vector<1x128xf32>
    %11 = vector.broadcast %9 : f32 to vector<1x128xf32>
    %12 = arith.mulf %11, %10 : vector<1x128xf32>
    %13 = arith.addf %8, %12 : vector<1x128xf32>
    %c3 = arith.constant 3 : index
    %14 = memref.load %arg1[%c3] : memref<4xf32, #tpu.memory_space<smem>>
    %c3_6 = arith.constant 3 : index
    %c0_7 = arith.constant 0 : index
    %15 = vector.load %arg2[%c3_6, %c0_7] : memref<4x128xf32, #tpu.memory_space<vmem>>, vector<1x128xf32>
    %16 = vector.broadcast %14 : f32 to vector<1x128xf32>
    %17 = arith.mulf %16, %15 : vector<1x128xf32>
    %18 = arith.addf %13, %17 : vector<1x128xf32>
    %c0_8 = arith.constant 0 : index
    %c0_9 = arith.constant 0 : index
    %19 = vector.load %arg3[%c0_8, %c0_9] : memref<1x128xf32, #tpu.memory_space<vmem>>, vector<1x128xf32>
    tpu.vector_store %arg3[%c0_8, %c0_9], %18 {strides = array<i32>} : memref<1x128xf32, #tpu.memory_space<vmem>>, vector<1x128xf32>,
    return
  }
  func.func @transform_0(%arg0: i32, %arg1: memref<4xf32, #tpu.memory_space<smem>>) -> (i32, i32) {
    %c0_i32 = arith.constant 0 : i32
    %c0_i32_0 = arith.constant 0 : i32
    return %c0_i32, %arg0 : i32, i32
  }
  func.func @transform_1(%arg0: i32, %arg1: memref<4xf32, #tpu.memory_space<smem>>) -> (i32, i32) {
    %c0_i32 = arith.constant 0 : i32
    %c0_i32_0 = arith.constant 0 : i32
    return %c0_i32, %arg0 : i32, i32
  }
}

</mosaic_0001>

<llo_original>
// kernel: tpu_custom_call.1
$region0: #{tpu_custom_call.1}
  #allocation0 [shape = 'u32[]', space=smem, size = 0x4, offset = 0x4, fixed_abs, tag = 'smem constant byte address 0x4 - core index']
  #allocation1 [shape = 'u32[144,128]{1,0:T(1,128)}', space=vmem, size = 0x12000, scoped, tag = 'internal scratch']
  #allocation2 [shape = 's32[1]{0}', space=sflag, size = 0x4, scoped, tag = 'scoped memory for tpu_custom_call.1']
  #allocation3 [shape = 'u8[512]{0}', space=smem, size = 0x200, scoped, tag = 'prefetched SMEM operand 0']
  %s0 = inlined_call_operand.hbm [shape: f32[4], index: 0, kind: input, shape index: {}]
  %s1 = inlined_call_operand.hbm [shape: f32[4,128], index: 1, kind: input, shape index: {}]
  %s2 = inlined_call_operand.hbm [shape: f32[1,128], index: 2, kind: output, shape index: {}]
  %s3 = sld [smem:[#allocation0]]
  $region18: #{tpu_custom_call.1} parent=0
    _
  %s5 = ssub.s32 1, %s3
  %s6 = scalar_select 0, %s5, %s3
  %8 = dma.hbm_to_smem %s0, 16, [#allocation3], [#allocation2]
  %9 = dma.done [#allocation2], 16
  %10 = sfence
  $region1: #{tpu_custom_call.1} parent=0
    #allocation4 [shape = 'u8[2048]{0}', space=vmem, size = 0x800, scoped, tag = 'input window, operand 1, single buffered']
    #allocation5 [shape = 's32[1]{0}', space=sflag, size = 0x4, scoped, tag = 'scoped memory for tpu_custom_call.1']
    #allocation6 [shape = 's32[1]{0}', space=sflag, size = 0x4, scoped, tag = 'scoped memory for tpu_custom_call.1']
    #allocation7 [shape = 'u8[512]{0}', space=vmem, size = 0x400, scoped, tag = 'output window, operand 0, single buffered']
    %11 = vsyncpa [#allocation5], 0
    %12 = vsyncpa [#allocation6], 0
    // Predicated region
    $region2: #{tpu_custom_call.1} parent=1 // pred_check
      _
    $region3: #{tpu_custom_call.1} parent=1 // pred_check_branch
      %14 = sbr.rel (0) target = $region5
    $region4: #{tpu_custom_call.1} parent=1 // pred_region
      %s16 = ssub.s32 64, 64
      %17 = vsyncadd [#allocation5], %s16
      %s19 = sshll.u32 [#allocation4], 4
      %s20 = int_to_ptr.vmem [resolvable:$true] %s19
      %22 = dma.hbm_to_vmem [thread:$0]  %s1, 64, %s20, [#allocation5]
    $region5: #{tpu_custom_call.1} parent=1 // pred_fallthru
      _
    // Predicated region
    $region6: #{tpu_custom_call.1} parent=1 // pred_check
      _
    $region7: #{tpu_custom_call.1} parent=1 // pred_check_branch
      %24 = sbr.rel (0) target = $region9
    $region8: #{tpu_custom_call.1} parent=1 // pred_region
      %25 = dma.done [#allocation5], 64
    $region9: #{tpu_custom_call.1} parent=1 // pred_fallthru
      _
    %s26 = sld [smem:[#allocation3]]
    %v27 = vld [vmem:[#allocation4] sm:$0x1]
    %v28 = vstv %s26
    %v29 = vmul.f32 %v28, %v27
    %s30 = sld [smem:[#allocation3 + $0x1]]
    %v31 = vld [vmem:[#allocation4 + $0x1] sm:$0x1]
    %v32 = vstv %s30
    %v33 = vmul.f32 %v32, %v31
    %v34 = vadd.f32 %v29, %v33
    %s35 = sld [smem:[#allocation3 + $0x2]]
    %v36 = vld [vmem:[#allocation4 + $0x2] sm:$0x1]
    %v37 = vstv %s35
    %v38 = vmul.f32 %v37, %v36
    %v39 = vadd.f32 %v34, %v38
    %s40 = sld [smem:[#allocation3 + $0x3]]
    %v41 = vld [vmem:[#allocation4 + $0x3] sm:$0x1]
    %v42 = vstv %s40
    %v43 = vmul.f32 %v42, %v41
    %v44 = vadd.f32 %v39, %v43
    %45 = vst [vmem:[#allocation7] sm:$0x1] %v44
    // Predicated region
    $region10: #{tpu_custom_call.1} parent=1 // pred_check
      _
    $region11: #{tpu_custom_call.1} parent=1 // pred_check_branch
      %47 = sbr.rel (0) target = $region13
    $region12: #{tpu_custom_call.1} parent=1 // pred_region
      %s49 = ssub.s32 16, 16
      %50 = vsyncadd [#allocation6], %s49
      %s52 = sshll.u32 [#allocation7], 4
      %s53 = int_to_ptr.vmem [resolvable:$true] %s52
      %55 = dma.vmem_to_hbm [thread:$0]  %s53, 16, %s2, [#allocation6]
    $region13: #{tpu_custom_call.1} parent=1 // pred_fallthru
      _
    // Predicated region
    $region14: #{tpu_custom_call.1} parent=1 // pred_check
      _
    $region15: #{tpu_custom_call.1} parent=1 // pred_check_branch
      %57 = sbr.rel (0) target = $region17
    $region16: #{tpu_custom_call.1} parent=1 // pred_region
      %58 = dma.done [#allocation6], 16
    $region17: #{tpu_custom_call.1} parent=1 // pred_fallthru
      _
    %59 = vsyncpa [#allocation5], 1
    %60 = vsyncpa [#allocation6], 1

</llo_original>
